<compile_context>
chip_gen: v7x
topology: tpu7x:2x2x1
jax: 0.10.0
libtpu: 0.0.40
codegen_flags: <defaults>
</compile_context>

<pallas_src>
import functools

import jax
import jax.numpy as jnp
from jax.experimental import pallas as pl
from jax.experimental.pallas import tpu as pltpu

EPS = 1e-5  # PyTorch BatchNorm2d default eps
_LANE = 128
_MIB = 1024 * 1024


def _trans_kernel(x_ref, scale_ref, bias_ref, w_ref, o_ref):
    # x_ref:     (1, 1, K, TR)   window-and-channel rows, spatial (ho*wo) on lanes
    # scale_ref: (1, K, 1)       folded BN scale (per sublane row)
    # bias_ref:  (1, K, 1)       folded BN bias
    # w_ref:     (1, O, K)       conv weight tiled 4x along K, * 0.25 (avg pool)
    # o_ref:     (1, 1, O, TR)
    y = jnp.maximum(x_ref[0, 0] * scale_ref[0] + bias_ref[0], 0.0)      # BN + ReLU
    o_ref[0, 0] = jnp.dot(w_ref[0], y,
                          preferred_element_type=jnp.float32).astype(o_ref.dtype)


def _vmem_capacity_bytes():
    try:
        return int(pltpu.get_tpu_info().vmem_capacity_bytes)
    except Exception:
        return 64 * _MIB  # conservative fallback: v7x per-TensorCore VMEM


def _pick_spatial_tile(rs, k, o, vmem_cap, tile_r):
    """Pick lane-tile TR along the per-image spatial axis (Ho*Wo) and #tiles."""
    if tile_r is not None:
        tr = int(tile_r)
    else:
        bytes_per_lane = (k + o) * 4                     # one x column + one o column (f32)
        target = 2 * _MIB                                # >=~2 MiB per grid step
        tile_budget = min(vmem_cap // 4, 32 * _MIB)      # double-buffered x/o tiles
        tr = max(target // bytes_per_lane, 512)
        tr = min(tr, max(tile_budget // (2 * bytes_per_lane), _LANE))
    if tr >= rs:
        return rs, 1                                     # single full block, no padding
    tr = max((tr // _LANE) * _LANE, _LANE)               # multiple of 128 lanes
    return tr, pl.cdiv(rs, tr)                           # ragged last block: OOB stores masked


def trans_block_pallas(x1, x2, pred, params, *, tile_r=None):
    """x1, x2: NCHW float32. Returns (y1, y2, pred), y* in NCHW."""
    N, C, H, W = x1.shape
    Ho, Wo = H // 2, W // 2
    Rs = Ho * Wo                      # per-image spatial extent after pooling
    w1 = params["w1"].reshape(params["w1"].shape[0], -1)   # (O, C) (accepts (O,C,1,1))
    w2 = params["w2"].reshape(params["w2"].shape[0], -1)
    O = w1.shape[0]
    K = 4 * C

    vmem_cap = _vmem_capacity_bytes()
    TR, num_r = _pick_spatial_tile(Rs, K, O, vmem_cap, tile_r)

    def pack(x):
        # NCHW -> (N, kh, kw, C, Ho, Wo) -> (N, 4*C, Ho*Wo).
        # K index = (kh*2+kw)*C + c, matching the 4x-tiled weight below.
        xh = x.reshape(N, C, Ho, 2, Wo, 2)
        xh = jnp.transpose(xh, (0, 3, 5, 1, 2, 4))
        return xh.reshape(N, K, Rs)

    def fold_bn(g, b, m, v):
        sc = g / jnp.sqrt(v + EPS)
        return sc, b - m * sc

    s1, b1 = fold_bn(params["g1"], params["b1"], params["m1"], params["v1"])
    s2, b2 = fold_bn(params["g2"], params["b2"], params["m2"], params["v2"])

    x_packed = jnp.stack([pack(x1), pack(x2)], axis=0)                    # (2, N, K, Rs)
    scale = jnp.stack([jnp.tile(s1, 4), jnp.tile(s2, 4)]).reshape(2, K, 1)
    bias = jnp.stack([jnp.tile(b1, 4), jnp.tile(b2, 4)]).reshape(2, K, 1)
    # Weight tiled 4x along K (same 1x1 conv for every window position) with the
    # 2x2 average-pool factor folded in.
    wt = jnp.stack([jnp.tile(w1, (1, 4)), jnp.tile(w2, (1, 4))], axis=0) * 0.25   # (2, O, K)

    # VMEM accounting (f32): double-buffered x/o tiles + weight/scale/bias, 2x slack.
    footprint = 2 * ((K + O) * TR + O * K + 2 * K) * 4
    vmem_limit = int(min(vmem_cap * 3 // 4, max(4 * footprint, 8 * _MIB)))

    cost = pl.CostEstimate(
        flops=2 * N * 2 * O * K * Rs,                          # 2 branches x N x (2*O*K*Rs)
        transcendentals=0,
        bytes_accessed=2 * N * (K + O) * Rs * 4 + 2 * (O * K + 2 * K) * 4,
    )

    out = pl.pallas_call(
        _trans_kernel,
        out_shape=jax.ShapeDtypeStruct((2, N, O, Rs), jnp.float32),
        grid=(2, N, num_r),            # (branch, image, spatial tile) -- fully independent
        in_specs=[
            pl.BlockSpec((1, 1, K, TR), lambda br, n, r: (br, n, 0, r)),
            pl.BlockSpec((1, K, 1), lambda br, n, r: (br, 0, 0)),
            pl.BlockSpec((1, K, 1), lambda br, n, r: (br, 0, 0)),
            pl.BlockSpec((1, O, K), lambda br, n, r: (br, 0, 0)),
        ],
        out_specs=pl.BlockSpec((1, 1, O, TR), lambda br, n, r: (br, n, 0, r)),
        compiler_params=pltpu.CompilerParams(
            dimension_semantics=("parallel", "parallel", "parallel"),
            vmem_limit_bytes=vmem_limit),
        cost_estimate=cost,
    )(x_packed, scale, bias, wt)

    # Pure reshape -- no transpose, no slice.
    y1 = out[0].reshape(N, O, Ho, Wo)
    y2 = out[1].reshape(N, O, Ho, Wo)
    return y1, y2, pred


trans_block_pallas_jit = jax.jit(trans_block_pallas, static_argnames=("tile_r",))


def _ref_branch(x, g, b, m, v, w):
    """Pure-JAX reference of bn -> relu -> 1x1 conv -> avg_pool2d(2). NCHW."""
    xn = (x - m[None, :, None, None]) / jnp.sqrt(v[None, :, None, None] + EPS)
    xn = xn * g[None, :, None, None] + b[None, :, None, None]
    y = jnp.maximum(xn, 0.0)
    w2d = w.reshape(w.shape[0], -1)
    z = jnp.einsum("nchw,oc->nohw", y, w2d)
    n, o, h, wd = z.shape
    return z.reshape(n, o, h // 2, 2, wd // 2, 2).mean(axis=(3, 5))


def _make_params(key, cin, cout):
    ks = jax.random.split(key, 10)
    return {
        "g1": jax.random.normal(ks[0], (cin,), jnp.float32) * 0.1 + 1.0,
        "b1": jax.random.normal(ks[1], (cin,), jnp.float32) * 0.1,
        "m1": jax.random.normal(ks[2], (cin,), jnp.float32) * 0.1,
        "v1": jnp.abs(jax.random.normal(ks[3], (cin,), jnp.float32)) * 0.5 + 0.5,
        "g2": jax.random.normal(ks[4], (cin,), jnp.float32) * 0.1 + 1.0,
        "b2": jax.random.normal(ks[5], (cin,), jnp.float32) * 0.1,
        "m2": jax.random.normal(ks[6], (cin,), jnp.float32) * 0.1,
        "v2": jnp.abs(jax.random.normal(ks[7], (cin,), jnp.float32)) * 0.5 + 0.5,
        # 1x1 conv weights, PyTorch shape (Cout, Cin, 1, 1) squeezed to (Cout, Cin)
        "w1": jax.random.normal(ks[8], (cout, cin), jnp.float32) * 0.2,
        "w2": jax.random.normal(ks[9], (cout, cin), jnp.float32) * 0.2,
    }


def _run_case(key, n, cin, cout, h, w, tile_r=None):
    ks = jax.random.split(key, 3)
    x1 = jax.random.normal(ks[0], (n, cin, h, w), jnp.float32)
    x2 = jax.random.normal(ks[1], (n, cin, h, w), jnp.float32)
    pred = jax.random.normal(ks[2], (n, cout), jnp.float32)
    params = _make_params(jax.random.fold_in(key, 7), cin, cout)

    y1, y2, pred_out = trans_block_pallas_jit(x1, x2, pred, params, tile_r=tile_r)
    jax.block_until_ready((y1, y2, pred_out))

    r1 = _ref_branch(x1, params["g1"], params["b1"], params["m1"], params["v1"], params["w1"])
    r2 = _ref_branch(x2, params["g2"], params["b2"], params["m2"], params["v2"], params["w2"])

    assert y1.shape == (n, cout, h // 2, w // 2)
    assert y2.shape == (n, cout, h // 2, w // 2)
    assert jnp.allclose(y1, r1, rtol=1e-5, atol=1e-5)
    assert jnp.allclose(y2, r2, rtol=1e-5, atol=1e-5)
    assert jnp.array_equal(pred_out, pred)


if __name__ == "__main__":
    key = jax.random.PRNGKey(0)
    # Small shapes consistent with the module: batch=2, channels 4->8, spatial 16.
    _run_case(jax.random.fold_in(key, 0), n=2, cin=4, cout=8, h=16, w=16)
    # Multi-tile spatial path with a ragged last tile (Ho*Wo=400, TR=128 -> 4 tiles):
    # exercises the no-pad / masked-OOB-store behavior.
    _run_case(jax.random.fold_in(key, 1), n=2, cin=4, cout=8, h=40, w=40, tile_r=128)
    print("KERNEL_OK")
</pallas_src>

<mosaic_0001>
module attributes {stable_mosaic.version = 11 : i64} {
  func.func @_trans_kernel(%arg0: i32, %arg1: i32, %arg2: i32, %arg3: memref<1x1x16x64xf32, #tpu.memory_space<vmem>>, %arg4: memref<1x16x1xf32, #tpu.memory_space<vmem>>, %arg5: memref<1x16x1xf32, #tpu.memory_space<vmem>>, %arg6: memref<1x8x16xf32, #tpu.memory_space<vmem>>, %arg7: memref<1x1x8x64xf32, #tpu.memory_space<vmem>>) attributes {dimension_semantics = [#tpu.dimension_semantics<parallel>, #tpu.dimension_semantics<parallel>, #tpu.dimension_semantics<parallel>], iteration_bounds = array<i64: 2, 2, 1>, scalar_prefetch = 0 : i64, scratch_operands = 0 : i64, tpu.core_type = #tpu.core_type<tc>, window_params = [{transform_indices = @transform_0, window_bounds = array<i64: 1, 1, 16, 64>}, {transform_indices = @transform_1, window_bounds = array<i64: 1, 16, 1>}, {transform_indices = @transform_2, window_bounds = array<i64: 1, 16, 1>}, {transform_indices = @transform_3, window_bounds = array<i64: 1, 8, 16>}, {transform_indices = @transform_4, window_bounds = array<i64: 1, 1, 8, 64>}]} {
    %c0 = arith.constant 0 : index
    %c0_0 = arith.constant 0 : index
    %c0_1 = arith.constant 0 : index
    %c0_2 = arith.constant 0 : index
    %0 = vector.load %arg3[%c0, %c0_0, %c0_1, %c0_2] : memref<1x1x16x64xf32, #tpu.memory_space<vmem>>, vector<1x1x16x64xf32>
    %1 = vector.shape_cast %0 : vector<1x1x16x64xf32> to vector<16x64xf32>
    %c0_3 = arith.constant 0 : index
    %c0_4 = arith.constant 0 : index
    %c0_5 = arith.constant 0 : index
    %2 = vector.load %arg4[%c0_3, %c0_4, %c0_5] : memref<1x16x1xf32, #tpu.memory_space<vmem>>, vector<1x16x1xf32>
    %3 = vector.shape_cast %2 : vector<1x16x1xf32> to vector<16x1xf32>
    %4 = vector.broadcast %3 : vector<16x1xf32> to vector<16x64xf32>
    %5 = arith.mulf %1, %4 : vector<16x64xf32>
    %c0_6 = arith.constant 0 : index
    %c0_7 = arith.constant 0 : index
    %c0_8 = arith.constant 0 : index
    %6 = vector.load %arg5[%c0_6, %c0_7, %c0_8] : memref<1x16x1xf32, #tpu.memory_space<vmem>>, vector<1x16x1xf32>
    %7 = vector.shape_cast %6 : vector<1x16x1xf32> to vector<16x1xf32>
    %8 = vector.broadcast %7 : vector<16x1xf32> to vector<16x64xf32>
    %9 = arith.addf %5, %8 : vector<16x64xf32>
    %cst = arith.constant 0.000000e+00 : f32
    %10 = vector.broadcast %cst : f32 to vector<16x64xf32>
    %11 = arith.maximumf %9, %10 : vector<16x64xf32>
    %c0_9 = arith.constant 0 : index
    %c0_10 = arith.constant 0 : index
    %c0_11 = arith.constant 0 : index
    %12 = vector.load %arg6[%c0_9, %c0_10, %c0_11] : memref<1x8x16xf32, #tpu.memory_space<vmem>>, vector<1x8x16xf32>
    %13 = vector.shape_cast %12 : vector<1x8x16xf32> to vector<8x16xf32>
    %cst_12 = arith.constant dense<0.000000e+00> : vector<8x64xf32>
    %14 = tpu.matmul %13, %11, %cst_12 {dimension_numbers = #tpu.dot_dimension_numbers<[1], [0], [0], [1], [0, 0, 1, 1], [], []>} : vector<8x16xf32>, vector<16x64xf32>, vector<8x64xf32> -> vector<8x64xf32>
    %c0_13 = arith.constant 0 : index
    %c0_14 = arith.constant 0 : index
    %c0_15 = arith.constant 0 : index
    %c0_16 = arith.constant 0 : index
    %15 = vector.load %arg7[%c0_13, %c0_14, %c0_15, %c0_16] : memref<1x1x8x64xf32, #tpu.memory_space<vmem>>, vector<1x1x8x64xf32>
    %16 = vector.shape_cast %15 : vector<1x1x8x64xf32> to vector<8x64xf32>
    %17 = vector.shape_cast %14 : vector<8x64xf32> to vector<1x1x8x64xf32>
    tpu.vector_store %arg7[%c0_13, %c0_14, %c0_15, %c0_16], %17 {strides = array<i32>} : memref<1x1x8x64xf32, #tpu.memory_space<vmem>>, vector<1x1x8x64xf32>,
    return
  }
  func.func @transform_0(%arg0: i32, %arg1: i32, %arg2: i32) -> (i32, i32, i32, i32) {
    %c0_i32 = arith.constant 0 : i32
    %c0_i32_0 = arith.constant 0 : i32
    return %arg0, %arg1, %c0_i32, %arg2 : i32, i32, i32, i32
  }
  func.func @transform_1(%arg0: i32, %arg1: i32, %arg2: i32) -> (i32, i32, i32) {
    %c0_i32 = arith.constant 0 : i32
    %c0_i32_0 = arith.constant 0 : i32
    %c0_i32_1 = arith.constant 0 : i32
    return %arg0, %c0_i32, %c0_i32_0 : i32, i32, i32
  }
  func.func @transform_2(%arg0: i32, %arg1: i32, %arg2: i32) -> (i32, i32, i32) {
    %c0_i32 = arith.constant 0 : i32
    %c0_i32_0 = arith.constant 0 : i32
    %c0_i32_1 = arith.constant 0 : i32
    return %arg0, %c0_i32, %c0_i32_0 : i32, i32, i32
  }
  func.func @transform_3(%arg0: i32, %arg1: i32, %arg2: i32) -> (i32, i32, i32) {
    %c0_i32 = arith.constant 0 : i32
    %c0_i32_0 = arith.constant 0 : i32
    %c0_i32_1 = arith.constant 0 : i32
    return %arg0, %c0_i32, %c0_i32_0 : i32, i32, i32
  }
  func.func @transform_4(%arg0: i32, %arg1: i32, %arg2: i32) -> (i32, i32, i32, i32) {
    %c0_i32 = arith.constant 0 : i32
    %c0_i32_0 = arith.constant 0 : i32
    return %arg0, %arg1, %c0_i32, %arg2 : i32, i32, i32, i32
  }
}

</mosaic_0001>

<llo_original>
// kernel: tile.39
$region0: #{tile.39}
  %s0 = inlined_call_operand.vmem [shape: f32[4,4], index: 0, kind: input, shape index: {}]
  %s1 = inlined_call_operand.vmem [shape: f32[1,16], index: 1, kind: output, shape index: {}]
  $region1: #{tile.39} parent=0
    #allocation0 [shape = 'u8[4096]{0}', space=vmem, size = 0x1000, scoped, tag = 'scoped mem for output reshape']
    #allocation1 [shape = 'u8[4096]{0}', space=vmem, size = 0x1000, scoped, tag = 'scoped mem for input reshape']
    %s3 = sshllo.u32 0, 4
    %v4 = vld [vmem:[%s0] sm:%s3]
    %5 = vst [vmem:[#allocation1] sm:%s3] %v4
    %v6 = vld [vmem:[#allocation1] sm:$0x1]
    %vm7 = vcmask 31744
    %8 = vst.msk [vmem:[#allocation0] sm:$0x1] %vm7, %v6
    %s9 = scalar_lea.vmem [#allocation1], 3
    %v10 = vld [vmem:[%s9] sm:$0x1]
    %11 = vrot.lane.b32.xlu0 %v10, 12
    %v12 = vpop.permute.xlu0 %11
    %vm13 = vcmask 130144
    %14 = vst.msk [vmem:[#allocation0] sm:$0x1] %vm13, %v12
    %s15 = scalar_lea.vmem [#allocation1], 2
    %v16 = vld [vmem:[%s15] sm:$0x1]
    %17 = vrot.lane.b32.xlu0 %v16, 8
    %v18 = vpop.permute.xlu0 %17
    %vm19 = vcmask 97344
    %20 = vst.msk [vmem:[#allocation0] sm:$0x1] %vm19, %v18
    %s21 = scalar_lea.vmem [#allocation1], 1
    %v22 = vld [vmem:[%s21] sm:$0x1]
    %23 = vrot.lane.b32.xlu0 %v22, 4
    %v24 = vpop.permute.xlu0 %23
    %vm25 = vcmask 64544
    %26 = vst.msk [vmem:[#allocation0] sm:$0x1] %vm25, %v24
    %s28 = sshllo.u32 0, 1
    %v30 = vld [vmem:[#allocation0] sm:%s28]
    %s31 = sshllo.u32 0, 1
    %32 = vst [vmem:[%s1] sm:%s31] %v30

// kernel: tile.37
$region0: #{tile.37}
  #allocation0 [shape = 's32[1]{0}', space=sflag, size = 0x4, scoped, tag = 'scoped memory for tile.37']
  %s0 = inlined_call_operand.vmem [shape: f32[4], index: 0, kind: input, shape index: {}]
  %s1 = inlined_call_operand.vmem [shape: f32[4,4], index: 1, kind: output, shape index: {}]
  // Predicated region
  $region2: #{tile.37} parent=0 // pred_check
    _
  $region3: #{tile.37} parent=0 // pred_check_branch
    %3 = sbr.rel (0) target = $region5
  $region4: #{tile.37} parent=0 // pred_region
    _
  $region5: #{tile.37} parent=0 // pred_fallthru
    _
  %v4 = vld [vmem:[%s0] ss:$0 sm:$0xff]
  %5 = vst [vmem:[%s1] sm:$0xf] %v4

// kernel: squeeze.2
$region0: #{squeeze.2}
  %s0 = inlined_call_operand.vmem [shape: f32[1,2,8,64], index: 0, kind: input, shape index: {}]
  %s1 = inlined_call_operand.hbm [shape: f32[2,8,8,8], index: 1, kind: output, shape index: {}]
  $region1: #{squeeze.2} parent=0
    #allocation0 [shape = 'u8[65536]{0}', space=vmem, size = 0x10000, scoped, tag = 'operand span for operand 1']
    #allocation1 [shape = 's32[1]{0}', space=sflag, size = 0x4, scoped, tag = 'scoped memory for squeeze.2']
    %2 = vsyncpa [#allocation1], 0
    %v3 = vld [vmem:[%s0] sm:$0xff]
    %vm4 = vcmask 64512
    %5 = vst.msk [vmem:[#allocation0] ss:$8 sm:$0xf] %vm4, %v3
    %6 = vst.msk [vmem:[#allocation0] ss:$8 sm:$0xf0] %vm4, %v3
    %s7 = scalar_lea.vmem %s0, 8
    %v8 = vld [vmem:[%s7] sm:$0xff]
    %vm9 = vcmask 64512
    %s10 = scalar_lea.vmem [#allocation0], 64
    %11 = vst.msk [vmem:[%s10] ss:$8 sm:$0xf] %vm9, %v8
    %s12 = scalar_lea.vmem [#allocation0], 64
    %13 = vst.msk [vmem:[%s12] ss:$8 sm:$0xf0] %vm9, %v8
    %v14 = vld [vmem:[%s0] sm:$0xff]
    %15 = vrot.lane.b32.xlu0 %v14, 120
    %v16 = vpop.permute.xlu0 %15
    %vm17 = vcmask 64512
    %s18 = scalar_lea.vmem [#allocation0], 1
    %19 = vst.msk [vmem:[%s18] ss:$8 sm:$0xf] %vm17, %v16
    %s20 = scalar_lea.vmem [#allocation0], 1
    %21 = vst.msk [vmem:[%s20] ss:$8 sm:$0xf0] %vm17, %v16
    %s22 = scalar_lea.vmem %s0, 8
    %v23 = vld [vmem:[%s22] sm:$0xff]
    %24 = vrot.lane.b32.xlu0 %v23, 120
    %v25 = vpop.permute.xlu0 %24
    %vm26 = vcmask 64512
    %s27 = scalar_lea.vmem [#allocation0], 65
    %28 = vst.msk [vmem:[%s27] ss:$8 sm:$0xf] %vm26, %v25
    %s29 = scalar_lea.vmem [#allocation0], 65
    %30 = vst.msk [vmem:[%s29] ss:$8 sm:$0xf0] %vm26, %v25
    %v31 = vld [vmem:[%s0] sm:$0xff]
    %32 = vrot.lane.b32.xlu0 %v31, 112
    %v33 = vpop.permute.xlu0 %32
    %vm34 = vcmask 64512
    %s35 = scalar_lea.vmem [#allocation0], 2
    %36 = vst.msk [vmem:[%s35] ss:$8 sm:$0xf] %vm34, %v33
    %s37 = scalar_lea.vmem [#allocation0], 2
    %38 = vst.msk [vmem:[%s37] ss:$8 sm:$0xf0] %vm34, %v33
    %s39 = scalar_lea.vmem %s0, 8
    %v40 = vld [vmem:[%s39] sm:$0xff]
    %41 = vrot.lane.b32.xlu0 %v40, 112
    %v42 = vpop.permute.xlu0 %41
    %vm43 = vcmask 64512
    %s44 = scalar_lea.vmem [#allocation0], 66
    %45 = vst.msk [vmem:[%s44] ss:$8 sm:$0xf] %vm43, %v42
    %s46 = scalar_lea.vmem [#allocation0], 66
    %47 = vst.msk [vmem:[%s46] ss:$8 sm:$0xf0] %vm43, %v42
    %v48 = vld [vmem:[%s0] sm:$0xff]
    %49 = vrot.lane.b32.xlu0 %v48, 104
    %v50 = vpop.permute.xlu0 %49
    %vm51 = vcmask 64512
    %s52 = scalar_lea.vmem [#allocation0], 3
    %53 = vst.msk [vmem:[%s52] ss:$8 sm:$0xf] %vm51, %v50
    %s54 = scalar_lea.vmem [#allocation0], 3
    %55 = vst.msk [vmem:[%s54] ss:$8 sm:$0xf0] %vm51, %v50
    %s56 = scalar_lea.vmem %s0, 8
    %v57 = vld [vmem:[%s56] sm:$0xff]
    %58 = vrot.lane.b32.xlu0 %v57, 104
    %v59 = vpop.permute.xlu0 %58
    %vm60 = vcmask 64512
    %s61 = scalar_lea.vmem [#allocation0], 67
    %62 = vst.msk [vmem:[%s61] ss:$8 sm:$0xf] %vm60, %v59
    %s63 = scalar_lea.vmem [#allocation0], 67
    %64 = vst.msk [vmem:[%s63] ss:$8 sm:$0xf0] %vm60, %v59
    %v65 = vld [vmem:[%s0] sm:$0xff]
    %66 = vrot.lane.b32.xlu0 %v65, 96
    %v67 = vpop.permute.xlu0 %66
    %vm68 = vcmask 64512
    %s69 = scalar_lea.vmem [#allocation0], 4
    %70 = vst.msk [vmem:[%s69] ss:$8 sm:$0xf] %vm68, %v67
    %s71 = scalar_lea.vmem [#allocation0], 4
    %72 = vst.msk [vmem:[%s71] ss:$8 sm:$0xf0] %vm68, %v67
    %s73 = scalar_lea.vmem %s0, 8
    %v74 = vld [vmem:[%s73] sm:$0xff]
    %75 = vrot.lane.b32.xlu0 %v74, 96
    %v76 = vpop.permute.xlu0 %75
    %vm77 = vcmask 64512
    %s78 = scalar_lea.vmem [#allocation0], 68
    %79 = vst.msk [vmem:[%s78] ss:$8 sm:$0xf] %vm77, %v76
    %s80 = scalar_lea.vmem [#allocation0], 68
    %81 = vst.msk [vmem:[%s80] ss:$8 sm:$0xf0] %vm77, %v76
    %v82 = vld [vmem:[%s0] sm:$0xff]
    %83 = vrot.lane.b32.xlu0 %v82, 88
    %v84 = vpop.permute.xlu0 %83
    %vm85 = vcmask 64512
    %s86 = scalar_lea.vmem [#allocation0], 5
    %87 = vst.msk [vmem:[%s86] ss:$8 sm:$0xf] %vm85, %v84
    %s88 = scalar_lea.vmem [#allocation0], 5
    %89 = vst.msk [vmem:[%s88] ss:$8 sm:$0xf0] %vm85, %v84
    %s90 = scalar_lea.vmem %s0, 8
    %v91 = vld [vmem:[%s90] sm:$0xff]
    %92 = vrot.lane.b32.xlu0 %v91, 88
    %v93 = vpop.permute.xlu0 %92
    %vm94 = vcmask 64512
    %s95 = scalar_lea.vmem [#allocation0], 69
    %96 = vst.msk [vmem:[%s95] ss:$8 sm:$0xf] %vm94, %v93
    %s97 = scalar_lea.vmem [#allocation0], 69
    %98 = vst.msk [vmem:[%s97] ss:$8 sm:$0xf0] %vm94, %v93
    %v99 = vld [vmem:[%s0] sm:$0xff]
    %100 = vrot.lane.b32.xlu0 %v99, 80
    %v101 = vpop.permute.xlu0 %100
    %vm102 = vcmask 64512
    %s103 = scalar_lea.vmem [#allocation0], 6
    %104 = vst.msk [vmem:[%s103] ss:$8 sm:$0xf] %vm102, %v101
    %s105 = scalar_lea.vmem [#allocation0], 6
    %106 = vst.msk [vmem:[%s105] ss:$8 sm:$0xf0] %vm102, %v101
    %s107 = scalar_lea.vmem %s0, 8
    %v108 = vld [vmem:[%s107] sm:$0xff]
    %109 = vrot.lane.b32.xlu0 %v108, 80
    %v110 = vpop.permute.xlu0 %109
    %vm111 = vcmask 64512
    %s112 = scalar_lea.vmem [#allocation0], 70
    %113 = vst.msk [vmem:[%s112] ss:$8 sm:$0xf] %vm111, %v110
    %s114 = scalar_lea.vmem [#allocation0], 70
    %115 = vst.msk [vmem:[%s114] ss:$8 sm:$0xf0] %vm111, %v110
    %v116 = vld [vmem:[%s0] sm:$0xff]
    %117 = vrot.lane.b32.xlu0 %v116, 72
    %v118 = vpop.permute.xlu0 %117
    %vm119 = vcmask 64512
    %s120 = scalar_lea.vmem [#allocation0], 7
    %121 = vst.msk [vmem:[%s120] ss:$8 sm:$0xf] %vm119, %v118
    %s122 = scalar_lea.vmem [#allocation0], 7
    %123 = vst.msk [vmem:[%s122] ss:$8 sm:$0xf0] %vm119, %v118
    %s124 = scalar_lea.vmem %s0, 8
    %v125 = vld [vmem:[%s124] sm:$0xff]
    %126 = vrot.lane.b32.xlu0 %v125, 72
    %v127 = vpop.permute.xlu0 %126
    %vm128 = vcmask 64512
    %s129 = scalar_lea.vmem [#allocation0], 71
    %130 = vst.msk [vmem:[%s129] ss:$8 sm:$0xf] %vm128, %v127
    %s131 = scalar_lea.vmem [#allocation0], 71
    %132 = vst.msk [vmem:[%s131] ss:$8 sm:$0xf0] %vm128, %v127
    %s134 = ssub.s32 2048, 2048
    %135 = vsyncadd [#allocation1], %s134
    %s137 = sshll.u32 [#allocation0], 4
    %s138 = int_to_ptr.vmem [resolvable:$true] %s137
    %140 = dma.vmem_to_hbm [thread:$0]  %s138, 2048, %s1, [#allocation1]
    %141 = dma.done [#allocation1], 2048
    %142 = vsyncpa [#allocation1], 1

// kernel: trans_block_pallas.1
$region0: #{trans_block_pallas.1}
  #allocation0 [shape = 'u32[]', space=smem, size = 0x4, offset = 0x4, fixed_abs, tag = 'smem constant byte address 0x4 - core index']
  #allocation1 [shape = 'u32[144,128]{1,0:T(1,128)}', space=vmem, size = 0x12000, scoped, tag = 'internal scratch']
  %s0 = inlined_call_operand.vmem [shape: f32[2,2,16,64], index: 0, kind: input, shape index: {}]
  %s1 = inlined_call_operand.vmem [shape: f32[2,16,1], index: 1, kind: input, shape index: {}]
  %s2 = inlined_call_operand.vmem [shape: f32[2,16,1], index: 2, kind: input, shape index: {}]
  %s3 = inlined_call_operand.vmem [shape: f32[2,8,16], index: 3, kind: input, shape index: {}]
  %s4 = inlined_call_operand.vmem [shape: f32[2,2,8,64], index: 4, kind: output, shape index: {}]
  %s5 = sld [smem:[#allocation0]]
  $region49: #{trans_block_pallas.1} parent=0
    _
  %s7 = ssub.s32 1, %s5
  %s8 = scalar_select 0, %s7, %s5
  loop: start=0, step=1, limit=6
  $region2: #{trans_block_pallas.1} parent=0 // loop_pre_header
    _
  $region3: #{trans_block_pallas.1} parent=0 // loop_header
    %s10 = sphi 0, %s14
    %p11 = scmp.ge.s32.totalorder %s10, 6
    %s17 = sphi 0, %s36
    %s18 = sphi 0, %s32
    %s19 = sphi 0, %s28
    %s20 = sphi 0, %s17
    %s21 = sphi 0, %s18
    %s22 = sphi 0, %s19
    %s23 = sphi 0, %s20
    %s24 = sphi 0, %s21
    %s25 = sphi 0, %s22
    %s43 = sphi 0, %s45
    %s46 = sphi 0, %s43
    %s47 = sphi 0, %s46
    %s63 = sphi 0, %s47
    %s69 = sphi 0, %s71
    %s72 = sphi 0, %s69
    %s73 = sphi 0, %s72
    %s89 = sphi 0, %s73
    %s95 = sphi 0, %s97
    %s98 = sphi 0, %s95
    %s99 = sphi 0, %s98
    %s115 = sphi 0, %s99
    %s121 = sphi 0, %s123
    %s124 = sphi 0, %s121
    %s125 = sphi 0, %s124
    %s141 = sphi 0, %s125
    %s151 = sphi 0, %s153
    %s154 = sphi 0, %s151
    %s155 = sphi 0, %s154
    %s171 = sphi 0, %s155
  $region4: #{trans_block_pallas.1} parent=0 // loop_header_branch
    %13 = sbr.rel (%p11) target = $region8
  $region5: #{trans_block_pallas.1} parent=0 // loop_body
    %s15 = ssub.s32 %s10, 1
    %s16 = ssub.s32 %s10, 2
    %s26 = sadd.s32 1, %s19
    %p27 = scmp.ge.s32.totalorder %s26, 1
    %s28 = scalar_select %p27, 0, %s26
    %s29 = sadd.s32 1, %s18
    %s30 = scalar_select %p27, %s29, %s18
    %p31 = scmp.ge.s32.totalorder %s30, 2
    %s32 = scalar_select %p31, 0, %s30
    %s33 = sadd.s32 1, %s17
    %s34 = scalar_select %p31, %s33, %s17
    %p35 = scmp.ge.s32.totalorder %s34, 2
    %s36 = scalar_select %p35, 0, %s34
    %s37 = ssub.s32 %s17, %s36
    %s38 = ssub.s32 %s18, %s32
    %s39 = sor.u32 %s37, %s38
    %s40 = ssub.s32 %s19, %s28
    %s41 = sor.u32 %s39, %s40
    %p42 = scmp.eq.s32.totalorder %s41, 0
    %s44 = sadd.s32 %s43, 1
    %s45 = scalar_select %p42, %s43, %s44
    %p48 = pneg %p42
    %p49 = scmp.eq.s32.totalorder %s10, 3
    %p50 = por %p48, %p49
    %p51 = scmp.ne.s32.totalorder %s43, %s46
    %p52 = scmp.eq.s32.totalorder %s10, 0
    %p53 = por %p51, %p52
    %p54 = scmp.ne.s32.totalorder %s43, %s46
    %p55 = scmp.eq.s32.totalorder %s15, 3
    %p56 = por %p54, %p55
    %p57 = scmp.ne.s32.totalorder %s46, %s47
    %p58 = scmp.eq.s32.totalorder %s15, 0
    %p59 = por %p57, %p58
    %p60 = scmp.ne.s32.totalorder %s46, %s47
    %p61 = scmp.eq.s32.totalorder %s16, 3
    %p62 = por %p60, %p61
    %p64 = scmp.ne.s32.totalorder %s47, %s63
    %p65 = scmp.eq.s32.totalorder %s16, 0
    %p66 = por %p64, %p65
    %s67 = ssub.s32 %s17, %s36
    %p68 = scmp.eq.s32.totalorder %s67, 0
    %s70 = sadd.s32 %s69, 1
    %s71 = scalar_select %p68, %s69, %s70
    %p74 = pneg %p68
    %p75 = scmp.eq.s32.totalorder %s10, 3
    %p76 = por %p74, %p75
    %p77 = scmp.ne.s32.totalorder %s69, %s72
    %p78 = scmp.eq.s32.totalorder %s10, 0
    %p79 = por %p77, %p78
    %p80 = scmp.ne.s32.totalorder %s69, %s72
    %p81 = scmp.eq.s32.totalorder %s15, 3
    %p82 = por %p80, %p81
    %p83 = scmp.ne.s32.totalorder %s72, %s73
    %p84 = scmp.eq.s32.totalorder %s15, 0
    %p85 = por %p83, %p84
    %p86 = scmp.ne.s32.totalorder %s72, %s73
    %p87 = scmp.eq.s32.totalorder %s16, 3
    %p88 = por %p86, %p87
    %p90 = scmp.ne.s32.totalorder %s73, %s89
    %p91 = scmp.eq.s32.totalorder %s16, 0
    %p92 = por %p90, %p91
    %s93 = ssub.s32 %s17, %s36
    %p94 = scmp.eq.s32.totalorder %s93, 0
    %s96 = sadd.s32 %s95, 1
    %s97 = scalar_select %p94, %s95, %s96
    %p100 = pneg %p94
    %p101 = scmp.eq.s32.totalorder %s10, 3
    %p102 = por %p100, %p101
    %p103 = scmp.ne.s32.totalorder %s95, %s98
    %p104 = scmp.eq.s32.totalorder %s10, 0
    %p105 = por %p103, %p104
    %p106 = scmp.ne.s32.totalorder %s95, %s98
    %p107 = scmp.eq.s32.totalorder %s15, 3
    %p108 = por %p106, %p107
    %p109 = scmp.ne.s32.totalorder %s98, %s99
    %p110 = scmp.eq.s32.totalorder %s15, 0
    %p111 = por %p109, %p110
    %p112 = scmp.ne.s32.totalorder %s98, %s99
    %p113 = scmp.eq.s32.totalorder %s16, 3
    %p114 = por %p112, %p113
    %p116 = scmp.ne.s32.totalorder %s99, %s115
    %p117 = scmp.eq.s32.totalorder %s16, 0
    %p118 = por %p116, %p117
    %s119 = ssub.s32 %s17, %s36
    %p120 = scmp.eq.s32.totalorder %s119, 0
    %s122 = sadd.s32 %s121, 1
    %s123 = scalar_select %p120, %s121, %s122
    %p126 = pneg %p120
    %p127 = scmp.eq.s32.totalorder %s10, 3
    %p128 = por %p126, %p127
    %p129 = scmp.ne.s32.totalorder %s121, %s124
    %p130 = scmp.eq.s32.totalorder %s10, 0
    %p131 = por %p129, %p130
    %p132 = scmp.ne.s32.totalorder %s121, %s124
    %p133 = scmp.eq.s32.totalorder %s15, 3
    %p134 = por %p132, %p133
    %p135 = scmp.ne.s32.totalorder %s124, %s125
    %p136 = scmp.eq.s32.totalorder %s15, 0
    %p137 = por %p135, %p136
    %p138 = scmp.ne.s32.totalorder %s124, %s125
    %p139 = scmp.eq.s32.totalorder %s16, 3
    %p140 = por %p138, %p139
    %p142 = scmp.ne.s32.totalorder %s125, %s141
    %p143 = scmp.eq.s32.totalorder %s16, 0
    %p144 = por %p142, %p143
    %s145 = ssub.s32 %s17, %s36
    %s146 = ssub.s32 %s18, %s32
    %s147 = sor.u32 %s145, %s146
    %s148 = ssub.s32 %s19, %s28
    %s149 = sor.u32 %s147, %s148
    %p150 = scmp.eq.s32.totalorder %s149, 0
    %s152 = sadd.s32 %s151, 1
    %s153 = scalar_select %p150, %s151, %s152
    %p156 = pneg %p150
    %p157 = scmp.eq.s32.totalorder %s10, 3
    %p158 = por %p156, %p157
    %p159 = scmp.ne.s32.totalorder %s151, %s154
    %p160 = scmp.eq.s32.totalorder %s10, 0
    %p161 = por %p159, %p160
    %p162 = scmp.ne.s32.totalorder %s151, %s154
    %p163 = scmp.eq.s32.totalorder %s15, 3
    %p164 = por %p162, %p163
    %p165 = scmp.ne.s32.totalorder %s154, %s155
    %p166 = scmp.eq.s32.totalorder %s15, 0
    %p167 = por %p165, %p166
    %p168 = scmp.ne.s32.totalorder %s154, %s155
    %p169 = scmp.eq.s32.totalorder %s16, 3
    %p170 = por %p168, %p169
    %p172 = scmp.ne.s32.totalorder %s155, %s171
    %p173 = scmp.eq.s32.totalorder %s16, 0
    %p174 = por %p172, %p173
    %p175 = scmp.le.s32.totalorder 1, %s10
    %p176 = scmp.lt.s32.totalorder %s10, 5
    %p177 = pnand %p175, %p176
    %p178 = pneg %p177
    // Predicated region
    $region9: #{trans_block_pallas.1} parent=5 // pred_check
      _
    $region10: #{trans_block_pallas.1} parent=5 // pred_check_branch
      %180 = sbr.rel (%p177) target = $region12
    $region11: #{trans_block_pallas.1} parent=5 // pred_region
      %s181 = ssub.s32 %s10, 1
    $region12: #{trans_block_pallas.1} parent=5 // pred_fallthru
      _
    %p182 = scmp.lt.s32.totalorder %s10, 4
    // Predicated region
    $region13: #{trans_block_pallas.1} parent=5 // pred_check
      %p183 = pneg %p182
    $region14: #{trans_block_pallas.1} parent=5 // pred_check_branch
      %185 = sbr.rel (%p183) target = $region16
    $region15: #{trans_block_pallas.1} parent=5 // pred_region
      // Predicated region
      $region17: #{trans_block_pallas.1} parent=15 // pred_check
        %p186 = pneg %p53
      $region18: #{trans_block_pallas.1} parent=15 // pred_check_branch
        %188 = sbr.rel (%p186) target = $region20
      $region19: #{trans_block_pallas.1} parent=15 // pred_region
        %p189 = scmp.lt.s32.totalorder %s17, 1
        %s190 = scalar_select %p189, %s17, 1
        %p191 = scmp.lt.s32.totalorder %s18, 1
        %s192 = scalar_select %p191, %s18, 1
        %p193 = scmp.lt.s32.totalorder %s19, 0
        %s194 = scalar_select %p193, %s19, 0
        %s195 = smul.addr %s192, 2
        %s196 = sadd.s32 %s194, %s195
        %s197 = smul.addr %s190, 4
        %s198 = sadd.s32 %s196, %s197
        %s199 = smul.addr %s198, 8
        %s200 = scalar_lea.vmem %s0, %s199
      $region20: #{trans_block_pallas.1} parent=15 // pred_fallthru
        _
      // Predicated region
      $region21: #{trans_block_pallas.1} parent=15 // pred_check
        %p201 = pneg %p79
      $region22: #{trans_block_pallas.1} parent=15 // pred_check_branch
        %203 = sbr.rel (%p201) target = $region24
      $region23: #{trans_block_pallas.1} parent=15 // pred_region
        %p204 = scmp.lt.s32.totalorder %s17, 1
        %s205 = scalar_select %p204, %s17, 1
        %s206 = smul.addr %s205, 2
        %s207 = smul.addr %s206, 8
        %s208 = scalar_lea.vmem %s1, %s207
      $region24: #{trans_block_pallas.1} parent=15 // pred_fallthru
        _
      // Predicated region
      $region25: #{trans_block_pallas.1} parent=15 // pred_check
        %p209 = pneg %p105
      $region26: #{trans_block_pallas.1} parent=15 // pred_check_branch
        %211 = sbr.rel (%p209) target = $region28
      $region27: #{trans_block_pallas.1} parent=15 // pred_region
        %p212 = scmp.lt.s32.totalorder %s17, 1
        %s213 = scalar_select %p212, %s17, 1
        %s214 = smul.addr %s213, 2
        %s215 = smul.addr %s214, 8
        %s216 = scalar_lea.vmem %s2, %s215
      $region28: #{trans_block_pallas.1} parent=15 // pred_fallthru
        _
      // Predicated region
      $region29: #{trans_block_pallas.1} parent=15 // pred_check
        %p217 = pneg %p131
      $region30: #{trans_block_pallas.1} parent=15 // pred_check_branch
        %219 = sbr.rel (%p217) target = $region32
      $region31: #{trans_block_pallas.1} parent=15 // pred_region
        %p220 = scmp.lt.s32.totalorder %s17, 1
        %s221 = scalar_select %p220, %s17, 1
        %s222 = smul.addr %s221, 8
        %s223 = scalar_lea.vmem %s3, %s222
      $region32: #{trans_block_pallas.1} parent=15 // pred_fallthru
        _
    $region16: #{trans_block_pallas.1} parent=5 // pred_fallthru
      _
    %p224 = scmp.le.s32.totalorder 1, %s10
    %p225 = scmp.lt.s32.totalorder %s10, 5
    %p226 = pnand %p224, %p225
    %p227 = pneg %p226
    // Predicated region
    $region33: #{trans_block_pallas.1} parent=5 // pred_check
      _
    $region34: #{trans_block_pallas.1} parent=5 // pred_check_branch
      %229 = sbr.rel (%p226) target = $region36
    $region35: #{trans_block_pallas.1} parent=5 // pred_region
      %s230 = ssub.s32 %s10, 1
      %p231 = scmp.lt.s32.totalorder %s20, 1
      %s232 = scalar_select %p231, %s20, 1
      %p233 = scmp.lt.s32.totalorder %s21, 1
      %s234 = scalar_select %p233, %s21, 1
      %p235 = scmp.lt.s32.totalorder %s22, 0
      %s236 = scalar_select %p235, %s22, 0
      %s237 = smul.addr %s234, 2
      %s238 = sadd.s32 %s236, %s237
      %s239 = smul.addr %s232, 4
      %s240 = sadd.s32 %s238, %s239
      %s241 = smul.addr %s240, 8
      %s242 = scalar_lea.vmem %s0, %s241
      %p243 = pneg %p59
      %p244 = pneg %p56
      %p245 = scmp.lt.s32.totalorder %s20, 1
      %s246 = scalar_select %p245, %s20, 1
      %s247 = smul.addr %s246, 2
      %s248 = smul.addr %s247, 8
      %s249 = scalar_lea.vmem %s1, %s248
      %p250 = pneg %p85
      %p251 = pneg %p82
      %p252 = scmp.lt.s32.totalorder %s20, 1
      %s253 = scalar_select %p252, %s20, 1
      %s254 = smul.addr %s253, 2
      %s255 = smul.addr %s254, 8
      %s256 = scalar_lea.vmem %s2, %s255
      %p257 = pneg %p111
      %p258 = pneg %p108
      %p259 = scmp.lt.s32.totalorder %s20, 1
      %s260 = scalar_select %p259, %s20, 1
      %s261 = smul.addr %s260, 8
      %s262 = scalar_lea.vmem %s3, %s261
      %p263 = pneg %p137
      %p264 = pneg %p134
      %p265 = pneg %p167
      %p266 = pneg %p164
      %p267 = scmp.lt.s32.totalorder %s20, 1
      %s268 = scalar_select %p267, %s20, 1
      %p269 = scmp.lt.s32.totalorder %s21, 1
      %s270 = scalar_select %p269, %s21, 1
      %p271 = scmp.lt.s32.totalorder %s22, 0
      %s272 = scalar_select %p271, %s22, 0
      %s273 = sadd.s32 %s272, %s270
      %s274 = smul.addr %s268, 2
      %s275 = sadd.s32 %s273, %s274
      %s276 = smul.addr %s275, 8
      %s277 = scalar_lea.vmem %s4, %s276
      %p278 = scmp.lt.s32.totalorder %s20, 1
      %s279 = scalar_select %p278, %s20, 1
      %p280 = scmp.lt.s32.totalorder %s21, 1
      %s281 = scalar_select %p280, %s21, 1
      %p282 = scmp.lt.s32.totalorder %s22, 0
      %s283 = scalar_select %p282, %s22, 0
      %s284 = smul.addr %s281, 2
      %s285 = sadd.s32 %s283, %s284
      %s286 = smul.addr %s279, 4
      %s287 = sadd.s32 %s285, %s286
      %s288 = smul.addr %s287, 8
      %s289 = scalar_lea.vmem %s0, %s288
      %p290 = scmp.lt.s32.totalorder %s20, 1
      %s291 = scalar_select %p290, %s20, 1
      %s292 = smul.addr %s291, 2
      %s293 = smul.addr %s292, 8
      %s294 = scalar_lea.vmem %s1, %s293
      %p295 = scmp.lt.s32.totalorder %s20, 1
      %s296 = scalar_select %p295, %s20, 1
      %s297 = smul.addr %s296, 2
      %s298 = smul.addr %s297, 8
      %s299 = scalar_lea.vmem %s2, %s298
      %p300 = scmp.lt.s32.totalorder %s20, 1
      %s301 = scalar_select %p300, %s20, 1
      %s302 = smul.addr %s301, 8
      %s303 = scalar_lea.vmem %s3, %s302
      %p304 = scmp.lt.s32.totalorder %s20, 1
      %s305 = scalar_select %p304, %s20, 1
      %p306 = scmp.lt.s32.totalorder %s21, 1
      %s307 = scalar_select %p306, %s21, 1
      %p308 = scmp.lt.s32.totalorder %s22, 0
      %s309 = scalar_select %p308, %s22, 0
      %s310 = sadd.s32 %s309, %s307
      %s311 = smul.addr %s305, 2
      %s312 = sadd.s32 %s310, %s311
      %s313 = smul.addr %s312, 8
      %s314 = scalar_lea.vmem %s4, %s313
      %v315 = vld [vmem:[%s289] sm:$0xff]
      %v316 = vld [vmem:[%s289 + $0x8] sm:$0xff]
      %v317 = vld [vmem:[%s294] sm:$0xff]
      %v318 = vld [vmem:[%s294 + $0x8] sm:$0xff]
      %320 = vset.pattern.permute.xlu0 0
      %321 = vperm.xlu0 %320, %v317
      %v322 = vpop.permute.xlu0 %321
      %325 = vset.pattern.permute.xlu0 0
      %326 = vperm.xlu0 %325, %v318
      %v327 = vpop.permute.xlu0 %326
      %v329 = vmul.f32 %v315, %v322
      %v330 = vmul.f32 %v316, %v327
      %v331 = vld [vmem:[%s299] sm:$0xff]
      %v332 = vld [vmem:[%s299 + $0x8] sm:$0xff]
      %334 = vset.pattern.permute.xlu0 0
      %335 = vperm.xlu0 %334, %v331
      %v336 = vpop.permute.xlu0 %335
      %339 = vset.pattern.permute.xlu0 0
      %340 = vperm.xlu0 %339, %v332
      %v341 = vpop.permute.xlu0 %340
      %v343 = vadd.f32 %v329, %v336
      %v344 = vadd.f32 %v330, %v341
      %v345 = vmax.f32 %v343, 0.0
      %v346 = vmax.f32 %v344, 0.0
      %v347 = vld [vmem:[%s303] sm:$0xff]
      %vm348 = vcmask 130048
      %v350 = vsel %vm348, %v347, 0
      %352 = vmatprep.subr.mxu0 0.0
      %353 = vmatpush1.msra.mxu0 %v345
      %354 = vmatprep.subr.mxu0 0.0
      %355 = vmatpush1.msra.mxu0 %v346
      %356 = vmatprep.subr.mxu0 0.0
      %357 = vmatpush1.msra.mxu0 0.0
      %358 = vmatprep.subr.mxu0 0.0
      %359 = vmatpush1.msra.mxu0 0.0
      %360 = vmatprep.subr.mxu0 0.0
      %361 = vmatpush1.msra.mxu0 0.0
      %362 = vmatprep.subr.mxu0 0.0
      %363 = vmatpush1.msra.mxu0 0.0
      %364 = vmatprep.subr.mxu0 0.0
      %365 = vmatpush1.msra.mxu0 0.0
      %366 = vmatprep.subr.mxu0 0.0
      %367 = vmatpush1.msra.mxu0 0.0
      %368 = vmatprep.subr.mxu0 0.0
      %369 = vmatpush1.msra.mxu0 0.0
      %370 = vmatprep.subr.mxu0 0.0
      %371 = vmatpush1.msra.mxu0 0.0
      %372 = vmatprep.subr.mxu0 0.0
      %373 = vmatpush1.msra.mxu0 0.0
      %374 = vmatprep.subr.mxu0 0.0
      %375 = vmatpush1.msra.mxu0 0.0
      %376 = vmatprep.subr.mxu0 0.0
      %377 = vmatpush1.msra.mxu0 0.0
      %378 = vmatprep.subr.mxu0 0.0
      %379 = vmatpush1.msra.mxu0 0.0
      %380 = vmatprep.subr.mxu0 0.0
      %381 = vmatpush1.msra.mxu0 0.0
      %382 = vmatprep.subr.mxu0 0.0
      %383 = vmatpush1.msra.mxu0 0.0
      %384 = vmatprep.subr.mxu0 0.0
      %385 = vmatpush1.msra.mxu0 0.0
      %386 = vmatprep.subr.mxu0 0.0
      %387 = vmatpush1.msra.mxu0 0.0
      %388 = vmatprep.subr.mxu0 0.0
      %389 = vmatpush1.msra.mxu0 0.0
      %390 = vmatprep.subr.mxu0 0.0
      %391 = vmatpush1.msra.mxu0 0.0
      %392 = vmatprep.subr.mxu0 0.0
      %393 = vmatpush1.msra.mxu0 0.0
      %394 = vmatprep.subr.mxu0 0.0
      %395 = vmatpush1.msra.mxu0 0.0
      %396 = vmatprep.subr.mxu0 0.0
      %397 = vmatpush1.msra.mxu0 0.0
      %398 = vmatprep.subr.mxu0 0.0
      %399 = vmatpush1.msra.mxu0 0.0
      %400 = vmatprep.subr.mxu0 0.0
      %401 = vmatpush1.msra.mxu0 0.0
      %402 = vmatprep.subr.mxu0 0.0
      %403 = vmatpush1.msra.mxu0 0.0
      %404 = vmatprep.subr.mxu0 0.0
      %405 = vmatpush1.msra.mxu0 0.0
      %406 = vmatprep.subr.mxu0 0.0
      %407 = vmatpush1.msra.mxu0 0.0
      %408 = vmatprep.subr.mxu0 0.0
      %409 = vmatpush1.msra.mxu0 0.0
      %410 = vmatprep.subr.mxu0 0.0
      %411 = vmatpush1.msra.mxu0 0.0
      %412 = vmatprep.subr.mxu0 0.0
      %413 = vmatpush1.msra.mxu0 0.0
      %414 = vmatprep.subr.mxu0 0.0
      %415 = vmatpush1.msra.mxu0 0.0
      %416 = vmatprep.mubr.f32.mxu0 0.0
      %417 = vmatmul.mubr.f32.gmra.mrb[0].mxu0 %v350
      %v418 = vpop.f32.mrb[0].mxu0
      %v419 = vadd.f32 0.0, %v418
      %v420 = vpop.f32.mrb[0].mxu0
      %421 = vdwg.mxu0
      %vm422 = vcmask 523264
      %423 = vst.msk [vmem:[%s314] sm:$0xff] %vm422, %v419
      %p424 = scmp.lt.s32.totalorder %s20, 1
      %s425 = scalar_select %p424, %s20, 1
      %p426 = scmp.lt.s32.totalorder %s21, 1
      %s427 = scalar_select %p426, %s21, 1
      %p428 = scmp.lt.s32.totalorder %s22, 0
      %s429 = scalar_select %p428, %s22, 0
      %s430 = sadd.s32 %s429, %s427
      %s431 = smul.addr %s425, 2
      %s432 = sadd.s32 %s430, %s431
      %s433 = smul.addr %s432, 8
      %s434 = scalar_lea.vmem %s4, %s433
      // Predicated region
      $region37: #{trans_block_pallas.1} parent=35 // pred_check
        %p435 = pneg %p164
      $region38: #{trans_block_pallas.1} parent=35 // pred_check_branch
        %437 = sbr.rel (%p435) target = $region40
      $region39: #{trans_block_pallas.1} parent=35 // pred_region
        _
      $region40: #{trans_block_pallas.1} parent=35 // pred_fallthru
        _
    $region36: #{trans_block_pallas.1} parent=5 // pred_fallthru
      _
    %p438 = scmp.le.s32.totalorder 2, %s10
    // Predicated region
    $region41: #{trans_block_pallas.1} parent=5 // pred_check
      %p439 = pneg %p438
    $region42: #{trans_block_pallas.1} parent=5 // pred_check_branch
      %441 = sbr.rel (%p439) target = $region44
    $region43: #{trans_block_pallas.1} parent=5 // pred_region
      %s442 = ssub.s32 %s10, 2
      // Predicated region
      $region45: #{trans_block_pallas.1} parent=43 // pred_check
        %p443 = pneg %p170
      $region46: #{trans_block_pallas.1} parent=43 // pred_check_branch
        %445 = sbr.rel (%p443) target = $region48
      $region47: #{trans_block_pallas.1} parent=43 // pred_region
        %p446 = scmp.lt.s32.totalorder %s23, 1
        %s447 = scalar_select %p446, %s23, 1
        %p448 = scmp.lt.s32.totalorder %s24, 1
        %s449 = scalar_select %p448, %s24, 1
        %p450 = scmp.lt.s32.totalorder %s25, 0
        %s451 = scalar_select %p450, %s25, 0
        %s452 = sadd.s32 %s451, %s449
        %s453 = smul.addr %s447, 2
        %s454 = sadd.s32 %s452, %s453
        %s455 = smul.addr %s454, 8
        %s456 = scalar_lea.vmem %s4, %s455
      $region48: #{trans_block_pallas.1} parent=43 // pred_fallthru
        _
    $region44: #{trans_block_pallas.1} parent=5 // pred_fallthru
      _
  $region6: #{trans_block_pallas.1} parent=0 // loop_footer
    %s14 = sadd.s32 1, %s10
  $region7: #{trans_block_pallas.1} parent=0 // loop_footer_branch
    %9 = sbr.rel target = $region3
  $region8: #{trans_block_pallas.1} parent=0 // loop_exit
    _

</llo_original>
